<compile_context>
chip_gen: v7x
topology: tpu7x:2x2x1
jax: 0.10.0
libtpu: 0.0.40
codegen_flags: <defaults>
</compile_context>

<pallas_src>
import jax
import jax.numpy as jnp
from jax.experimental import pallas as pl
from jax.experimental.pallas import tpu as pltpu

_LANES = 128
_SUBLANES = 8


def _cdiv(a, b):
    return -(-a // b)


def _round_up(x, m):
    return _cdiv(x, m) * m


def _additive_decomp_kernel(base_ref, ultra_ref, dev_ref, part_ref, out_ref):
    # weight = base * sigmoid(ultra + dev * part), computed in f32.
    b = base_ref[...].astype(jnp.float32)
    u = ultra_ref[...].astype(jnp.float32)
    d = dev_ref[...].astype(jnp.float32)
    p = part_ref[...].astype(jnp.float32)
    out_ref[...] = (b * jax.nn.sigmoid(u + d * p)).astype(out_ref.dtype)


def _vmem_capacity_bytes(vmem_bytes=None):
    """VMEM capacity used for block sizing: explicit override > HW query > conservative."""
    if vmem_bytes is not None:
        return int(vmem_bytes)
    try:
        cap = int(pltpu.get_tpu_info().vmem_capacity_bytes)
        if cap > 0:
            return cap
    except Exception:
        pass
    # Unknown target: size for the smallest-VMEM generation (v7x, 64 MiB)
    # so blocks never overshoot the scoped VMEM limit.
    return 64 * 1024 * 1024


def _canonical_2d(x):
    """Zero-/low-copy 2-D view of a parameter tensor (never pads)."""
    shape = x.shape
    if x.ndim == 2:
        return x                                   # untouched (common case)
    if x.ndim < 2:
        n = max(1, x.size)
        if n % _LANES == 0 and n > _LANES:
            return x.reshape(n // _LANES, _LANES)
        return x.reshape(1, n)
    # ndim > 2
    if shape[-1] % _LANES == 0:
        return x.reshape(-1, shape[-1])            # lane-dense, usually a bitcast
    if x.size % _LANES == 0:
        return x.reshape(-1, _LANES)               # compact lane-dense fallback
    return x.reshape(-1, shape[-1])                # correctness fallback


def additive_decomposed_weight_forward(base, ultra, hm70a, minisono, wrist, forearm,
                                       device_hm70a=True, part_wrist=True,
                                       max_block_bytes=None, vmem_bytes=None):
    """weight = base * sigmoid(ultra + device_weight * part_weight) on TPU.

    Accepts parameter tensors of any (identical) shape; streamed through a
    row-tiled elementwise Pallas kernel without host-side pad/slice copies.
    `max_block_bytes` optionally overrides the per-operand block-byte budget
    (mainly for testing the tiled path); `vmem_bytes` optionally pins the
    target's VMEM capacity for AOT / off-device sizing.
    """
    device_weight = hm70a if device_hm70a else minisono
    part_weight = wrist if part_wrist else forearm

    orig_shape = base.shape
    out_dtype = jnp.result_type(base.dtype, ultra.dtype,
                                device_weight.dtype, part_weight.dtype)

    b2 = _canonical_2d(base)
    u2 = _canonical_2d(ultra)
    d2 = _canonical_2d(device_weight)
    p2 = _canonical_2d(part_weight)
    R, C = b2.shape

    # Widest itemsize across all streams (operands may have mixed dtypes).
    itemsize = max(jnp.dtype(t.dtype).itemsize
                   for t in (base, ultra, device_weight, part_weight))
    itemsize = max(itemsize, jnp.dtype(out_dtype).itemsize)

    vmem_cap = _vmem_capacity_bytes(vmem_bytes)
    small_vmem = vmem_cap <= (64 << 20)            # v7x-class part (2 TCs, 64 MiB VMEM)
    per_block_cap = (3 << 20) if small_vmem else (4 << 20)
    if max_block_bytes is not None:
        per_block_cap = int(max_block_bytes)

    # ---- column tiling: keep the full last dim unless a single 8-row slab
    #      would blow the block budget (then tile it in lane multiples). ----
    c_pad = _round_up(C, _LANES)
    if C <= _LANES or _SUBLANES * c_pad * itemsize <= per_block_cap:
        tile_c = C
    else:
        tile_c = max(_LANES,
                     (per_block_cap // (_SUBLANES * itemsize)) // _LANES * _LANES)
    tile_c = min(tile_c, C)
    tile_c_bytes = _round_up(tile_c, _LANES) * itemsize

    # ---- row tiling from the VMEM budget ----
    tile_r = max(_SUBLANES,
                 (per_block_cap // tile_c_bytes) // _SUBLANES * _SUBLANES)

    # On 2-TensorCore parts, cap the row tile so the grid has >= ~8 steps
    # (keeping each block >= ~512 KiB) so the parallel axis load-balances.
    if small_vmem and tile_c == C:
        rows_for_steps = _round_up(_cdiv(R, 8), _SUBLANES)
        rows_for_min_bytes = _round_up(_cdiv(512 << 10, tile_c_bytes), _SUBLANES)
        tile_r = min(tile_r, max(rows_for_steps, rows_for_min_bytes))
    tile_r = min(tile_r, R)

    gr = _cdiv(R, tile_r)
    gc = _cdiv(C, tile_c)

    block_bytes = _round_up(tile_r, _SUBLANES) * tile_c_bytes
    pipeline_bytes = 5 * 2 * block_bytes           # 4 in + 1 out, double-buffered
    vmem_limit = int(min(vmem_cap // 2,
                         max(16 << 20, pipeline_bytes + (8 << 20))))

    out_shape = jax.ShapeDtypeStruct((R, C), out_dtype)

    if gr * gc == 1:
        # Tiny parameter tensor: single full-array block, no grid -- one DMA in
        # per operand and one out, no per-grid-step overhead.
        out2 = pl.pallas_call(
            _additive_decomp_kernel,
            out_shape=out_shape,
            compiler_params=pltpu.CompilerParams(vmem_limit_bytes=vmem_limit),
        )(b2, u2, d2, p2)
    elif gc == 1:
        spec = pl.BlockSpec((tile_r, C), lambda i: (i, 0))
        out2 = pl.pallas_call(
            _additive_decomp_kernel,
            out_shape=out_shape,
            grid=(gr,),                            # ragged last block handled by Pallas
            in_specs=[spec, spec, spec, spec],
            out_specs=spec,
            compiler_params=pltpu.CompilerParams(
                dimension_semantics=("parallel",),  # shards across v7x's 2 TCs
                vmem_limit_bytes=vmem_limit),
        )(b2, u2, d2, p2)
    else:
        spec = pl.BlockSpec((tile_r, tile_c), lambda i, j: (i, j))
        out2 = pl.pallas_call(
            _additive_decomp_kernel,
            out_shape=out_shape,
            grid=(gr, gc),
            in_specs=[spec, spec, spec, spec],
            out_specs=spec,
            compiler_params=pltpu.CompilerParams(
                dimension_semantics=("parallel", "parallel"),
                vmem_limit_bytes=vmem_limit),
        )(b2, u2, d2, p2)

    return out2.reshape(orig_shape)


def _reference(base, ultra, dev, part):
    return base * jax.nn.sigmoid(ultra + dev * part)


if __name__ == "__main__":
    key = jax.random.PRNGKey(0)

    def make_params(shape, scale=1.0):
        ks = jax.random.split(key, 6)
        base = jax.random.normal(ks[0], shape, dtype=jnp.float32)
        ultra = jax.random.normal(ks[1], shape, dtype=jnp.float32)
        hm70a = scale * jax.random.normal(ks[2], shape, dtype=jnp.float32)
        minisono = scale * jax.random.normal(ks[3], shape, dtype=jnp.float32)
        wrist = scale * jax.random.normal(ks[4], shape, dtype=jnp.float32)
        forearm = scale * jax.random.normal(ks[5], shape, dtype=jnp.float32)
        return base, ultra, hm70a, minisono, wrist, forearm

    # Case 1: aligned 2-D parameter -> single-block (no-grid) path, default branch.
    shape1 = (32, 128)
    p1 = make_params(shape1)
    out1 = jax.block_until_ready(
        additive_decomposed_weight_forward(*p1, device_hm70a=True, part_wrist=True))
    ref1 = _reference(p1[0], p1[1], p1[2], p1[4])
    assert out1.shape == shape1 and out1.dtype == jnp.float32
    assert jnp.allclose(out1, ref1, atol=1e-6, rtol=1e-6)

    # Case 2: non-128-aligned 2-D shape streamed in its ORIGINAL layout
    # (no pad / slice copies), forced small block budget -> row-tiled grid
    # (tile_r = 32, grid = (7,)) with a ragged final block and masked tail
    # lane stores.  Also exercises the miniSONO / forearm branch.
    shape2 = (200, 130)
    p2 = make_params(shape2, scale=0.5)
    out2 = jax.block_until_ready(
        additive_decomposed_weight_forward(
            *p2, device_hm70a=False, part_wrist=False,
            max_block_bytes=_SUBLANES * 256 * 4 * 4))
    ref2 = _reference(p2[0], p2[1], p2[3], p2[5])
    assert out2.shape == shape2 and out2.dtype == jnp.float32
    assert jnp.allclose(out2, ref2, atol=1e-6, rtol=1e-6)

    # Case 3: >2-D parameter with lane-aligned last dim -> collapsed to
    # (96, 128) by a layout-preserving reshape; HM70A / forearm branch.
    shape3 = (4, 24, 128)
    p3 = make_params(shape3)
    out3 = jax.block_until_ready(
        additive_decomposed_weight_forward(*p3, device_hm70a=True, part_wrist=False))
    ref3 = _reference(p3[0], p3[1], p3[2], p3[5])
    assert out3.shape == shape3 and out3.dtype == jnp.float32
    assert jnp.allclose(out3, ref3, atol=1e-6, rtol=1e-6)

    # Case 4: small 1-D parameter (< 128 elements) -> (1, N) single block.
    shape4 = (96,)
    p4 = make_params(shape4)
    out4 = jax.block_until_ready(
        additive_decomposed_weight_forward(*p4, device_hm70a=True, part_wrist=True))
    ref4 = _reference(p4[0], p4[1], p4[2], p4[4])
    assert out4.shape == shape4 and out4.dtype == jnp.float32
    assert jnp.allclose(out4, ref4, atol=1e-6, rtol=1e-6)

    print("KERNEL_OK")
</pallas_src>

<mosaic_0001>
module attributes {stable_mosaic.version = 11 : i64} {
  func.func @_additive_decomp_kernel(%arg0: memref<32x128xf32, #tpu.memory_space<vmem>>, %arg1: memref<32x128xf32, #tpu.memory_space<vmem>>, %arg2: memref<32x128xf32, #tpu.memory_space<vmem>>, %arg3: memref<32x128xf32, #tpu.memory_space<vmem>>, %arg4: memref<32x128xf32, #tpu.memory_space<vmem>>) attributes {dimension_semantics = [], scalar_prefetch = 0 : i64, scratch_operands = 0 : i64, tpu.core_type = #tpu.core_type<tc>} {
    %c0 = arith.constant 0 : index
    %c0_0 = arith.constant 0 : index
    %0 = vector.load %arg0[%c0, %c0_0] : memref<32x128xf32, #tpu.memory_space<vmem>>, vector<32x128xf32>
    %c0_1 = arith.constant 0 : index
    %c0_2 = arith.constant 0 : index
    %1 = vector.load %arg1[%c0_1, %c0_2] : memref<32x128xf32, #tpu.memory_space<vmem>>, vector<32x128xf32>
    %c0_3 = arith.constant 0 : index
    %c0_4 = arith.constant 0 : index
    %2 = vector.load %arg2[%c0_3, %c0_4] : memref<32x128xf32, #tpu.memory_space<vmem>>, vector<32x128xf32>
    %c0_5 = arith.constant 0 : index
    %c0_6 = arith.constant 0 : index
    %3 = vector.load %arg3[%c0_5, %c0_6] : memref<32x128xf32, #tpu.memory_space<vmem>>, vector<32x128xf32>
    %4 = arith.mulf %2, %3 : vector<32x128xf32>
    %5 = arith.addf %1, %4 : vector<32x128xf32>
    %6 = arith.negf %5 : vector<32x128xf32>
    %7 = math.exp %6 : vector<32x128xf32>
    %cst = arith.constant 1.000000e+00 : f32
    %8 = vector.broadcast %cst : f32 to vector<32x128xf32>
    %9 = arith.addf %8, %7 : vector<32x128xf32>
    %10 = arith.divf %8, %9 : vector<32x128xf32>
    %11 = arith.mulf %0, %10 : vector<32x128xf32>
    %c0_7 = arith.constant 0 : index
    %c0_8 = arith.constant 0 : index
    %12 = vector.load %arg4[%c0_7, %c0_8] : memref<32x128xf32, #tpu.memory_space<vmem>>, vector<32x128xf32>
    tpu.vector_store %arg4[%c0_7, %c0_8], %11 {strides = array<i32>} : memref<32x128xf32, #tpu.memory_space<vmem>>, vector<32x128xf32>,
    return
  }
}

</mosaic_0001>

<llo_original>
// kernel: tpu_custom_call.1
$region0: #{tpu_custom_call.1}
  #allocation0 [shape = 'u32[]', space=smem, size = 0x4, offset = 0x4, fixed_abs, tag = 'smem constant byte address 0x4 - core index']
  #allocation1 [shape = 'u32[144,128]{1,0:T(1,128)}', space=vmem, size = 0x12000, scoped, tag = 'internal scratch']
  %s0 = inlined_call_operand.hbm [shape: f32[32,128], index: 0, kind: input, shape index: {}]
  %s1 = inlined_call_operand.hbm [shape: f32[32,128], index: 1, kind: input, shape index: {}]
  %s2 = inlined_call_operand.hbm [shape: f32[32,128], index: 2, kind: input, shape index: {}]
  %s3 = inlined_call_operand.hbm [shape: f32[32,128], index: 3, kind: input, shape index: {}]
  %s4 = inlined_call_operand.hbm [shape: f32[32,128], index: 4, kind: output, shape index: {}]
  %s5 = sld [smem:[#allocation0]]
  $region42: #{tpu_custom_call.1} parent=0
    _
  %s7 = ssub.s32 1, %s5
  %s8 = scalar_select 0, %s7, %s5
  $region1: #{tpu_custom_call.1} parent=0
    #allocation2 [shape = 'u8[16384]{0}', space=vmem, size = 0x4000, scoped, tag = 'input window, operand 0, single buffered']
    #allocation3 [shape = 's32[1]{0}', space=sflag, size = 0x4, scoped, tag = 'scoped memory for tpu_custom_call.1']
    #allocation4 [shape = 's32[1]{0}', space=sflag, size = 0x4, scoped, tag = 'scoped memory for tpu_custom_call.1']
    #allocation5 [shape = 'u8[16384]{0}', space=vmem, size = 0x4000, scoped, tag = 'input window, operand 1, single buffered']
    #allocation6 [shape = 's32[1]{0}', space=sflag, size = 0x4, scoped, tag = 'scoped memory for tpu_custom_call.1']
    #allocation7 [shape = 'u8[16384]{0}', space=vmem, size = 0x4000, scoped, tag = 'input window, operand 2, single buffered']
    #allocation8 [shape = 'u8[16384]{0}', space=vmem, size = 0x4000, scoped, tag = 'input window, operand 3, single buffered']
    #allocation9 [shape = 's32[1]{0}', space=sflag, size = 0x4, scoped, tag = 'scoped memory for tpu_custom_call.1']
    #allocation10 [shape = 'u8[16384]{0}', space=vmem, size = 0x4000, scoped, tag = 'output window, operand 0, single buffered']
    %9 = vsyncpa [#allocation3], 0
    %10 = vsyncpa [#allocation6], 0
    %11 = vsyncpa [#allocation9], 0
    %12 = vsyncpa [#allocation4], 0
    // Predicated region
    $region2: #{tpu_custom_call.1} parent=1 // pred_check
      _
    $region3: #{tpu_custom_call.1} parent=1 // pred_check_branch
      %14 = sbr.rel (0) target = $region5
    $region4: #{tpu_custom_call.1} parent=1 // pred_region
      %s16 = ssub.s32 512, 512
      %17 = vsyncadd [#allocation3], %s16
      %s18 = sshll.u32 [#allocation2], 4
      %s19 = int_to_ptr.vmem [resolvable:$true] %s18
      %24 = dma.hbm_to_vmem [thread:$0]  %s0, 512, %s19, [#allocation3], 128, 128, 8
    $region5: #{tpu_custom_call.1} parent=1 // pred_fallthru
      _
    // Predicated region
    $region6: #{tpu_custom_call.1} parent=1 // pred_check
      _
    $region7: #{tpu_custom_call.1} parent=1 // pred_check_branch
      %26 = sbr.rel (0) target = $region9
    $region8: #{tpu_custom_call.1} parent=1 // pred_region
      %s28 = ssub.s32 512, 512
      %29 = vsyncadd [#allocation6], %s28
      %s30 = sshll.u32 [#allocation5], 4
      %s31 = int_to_ptr.vmem [resolvable:$true] %s30
      %36 = dma.hbm_to_vmem [thread:$0]  %s1, 512, %s31, [#allocation6], 128, 128, 8
    $region9: #{tpu_custom_call.1} parent=1 // pred_fallthru
      _
    // Predicated region
    $region10: #{tpu_custom_call.1} parent=1 // pred_check
      _
    $region11: #{tpu_custom_call.1} parent=1 // pred_check_branch
      %38 = sbr.rel (0) target = $region13
    $region12: #{tpu_custom_call.1} parent=1 // pred_region
      %s40 = ssub.s32 512, 512
      %41 = vsyncadd [#allocation6], %s40
      %s42 = sshll.u32 [#allocation7], 4
      %s43 = int_to_ptr.vmem [resolvable:$true] %s42
      %48 = dma.hbm_to_vmem [thread:$0]  %s2, 512, %s43, [#allocation6], 128, 128, 8
    $region13: #{tpu_custom_call.1} parent=1 // pred_fallthru
      _
    // Predicated region
    $region14: #{tpu_custom_call.1} parent=1 // pred_check
      _
    $region15: #{tpu_custom_call.1} parent=1 // pred_check_branch
      %50 = sbr.rel (0) target = $region17
    $region16: #{tpu_custom_call.1} parent=1 // pred_region
      %s52 = ssub.s32 512, 512
      %53 = vsyncadd [#allocation9], %s52
      %s54 = sshll.u32 [#allocation8], 4
      %s55 = int_to_ptr.vmem [resolvable:$true] %s54
      %60 = dma.hbm_to_vmem [thread:$0]  %s3, 512, %s55, [#allocation9], 128, 128, 8
    $region17: #{tpu_custom_call.1} parent=1 // pred_fallthru
      _
    // Predicated region
    $region18: #{tpu_custom_call.1} parent=1 // pred_check
      _
    $region19: #{tpu_custom_call.1} parent=1 // pred_check_branch
      %62 = sbr.rel (0) target = $region21
    $region20: #{tpu_custom_call.1} parent=1 // pred_region
      %63 = dma.done [#allocation3], 512
    $region21: #{tpu_custom_call.1} parent=1 // pred_fallthru
      _
    // Predicated region
    $region22: #{tpu_custom_call.1} parent=1 // pred_check
      _
    $region23: #{tpu_custom_call.1} parent=1 // pred_check_branch
      %65 = sbr.rel (0) target = $region25
    $region24: #{tpu_custom_call.1} parent=1 // pred_region
      %66 = dma.done [#allocation6], 512
    $region25: #{tpu_custom_call.1} parent=1 // pred_fallthru
      _
    // Predicated region
    $region26: #{tpu_custom_call.1} parent=1 // pred_check
      _
    $region27: #{tpu_custom_call.1} parent=1 // pred_check_branch
      %68 = sbr.rel (0) target = $region29
    $region28: #{tpu_custom_call.1} parent=1 // pred_region
      %69 = dma.done [#allocation6], 512
    $region29: #{tpu_custom_call.1} parent=1 // pred_fallthru
      _
    // Predicated region
    $region30: #{tpu_custom_call.1} parent=1 // pred_check
      _
    $region31: #{tpu_custom_call.1} parent=1 // pred_check_branch
      %71 = sbr.rel (0) target = $region33
    $region32: #{tpu_custom_call.1} parent=1 // pred_region
      %72 = dma.done [#allocation9], 512
    $region33: #{tpu_custom_call.1} parent=1 // pred_fallthru
      _
    %v73 = vld [vmem:[#allocation2] sm:$0xff]
    %v74 = vld [vmem:[#allocation2 + $0x8] sm:$0xff]
    %v75 = vld [vmem:[#allocation2 + $0x10] sm:$0xff]
    %v76 = vld [vmem:[#allocation2 + $0x18] sm:$0xff]
    %v77 = vld [vmem:[#allocation5] sm:$0xff]
    %v78 = vld [vmem:[#allocation5 + $0x8] sm:$0xff]
    %v79 = vld [vmem:[#allocation5 + $0x10] sm:$0xff]
    %v80 = vld [vmem:[#allocation5 + $0x18] sm:$0xff]
    %v81 = vld [vmem:[#allocation7] sm:$0xff]
    %v82 = vld [vmem:[#allocation7 + $0x8] sm:$0xff]
    %v83 = vld [vmem:[#allocation7 + $0x10] sm:$0xff]
    %v84 = vld [vmem:[#allocation7 + $0x18] sm:$0xff]
    %v85 = vld [vmem:[#allocation8] sm:$0xff]
    %v86 = vld [vmem:[#allocation8 + $0x8] sm:$0xff]
    %v87 = vld [vmem:[#allocation8 + $0x10] sm:$0xff]
    %v88 = vld [vmem:[#allocation8 + $0x18] sm:$0xff]
    %v89 = vmul.f32 %v81, %v85
    %v90 = vmul.f32 %v82, %v86
    %v91 = vmul.f32 %v83, %v87
    %v92 = vmul.f32 %v84, %v88
    %v93 = vadd.f32 %v77, %v89
    %v94 = vadd.f32 %v78, %v90
    %v95 = vadd.f32 %v79, %v91
    %v96 = vadd.f32 %v80, %v92
    %v97 = vxor.u32 %v93, 2147483648
    %v98 = vxor.u32 %v94, 2147483648
    %v99 = vxor.u32 %v95, 2147483648
    %v100 = vxor.u32 %v96, 2147483648
    %v101 = vmul.f32 %v97, 1.442695
    %v102 = vpow.pop %v101
    %v103 = vmul.f32 %v98, 1.442695
    %v104 = vpow.pop %v103
    %v105 = vmul.f32 %v99, 1.442695
    %v106 = vpow.pop %v105
    %v107 = vmul.f32 %v100, 1.442695
    %v108 = vpow.pop %v107
    %v109 = vadd.f32 %v102, 1.0
    %v110 = vadd.f32 %v104, 1.0
    %v111 = vadd.f32 %v106, 1.0
    %v112 = vadd.f32 %v108, 1.0
    %v113 = vrcp.pop %v109
    %v114 = vmul.f32 1.0, %v113
    %v115 = vrcp.pop %v110
    %v116 = vmul.f32 1.0, %v115
    %v117 = vrcp.pop %v111
    %v118 = vmul.f32 1.0, %v117
    %v119 = vrcp.pop %v112
    %v120 = vmul.f32 1.0, %v119
    %v121 = vmul.f32 %v73, %v114
    %v122 = vmul.f32 %v74, %v116
    %v123 = vmul.f32 %v75, %v118
    %v124 = vmul.f32 %v76, %v120
    %125 = vst [vmem:[#allocation10] sm:$0xff] %v121
    %126 = vst [vmem:[#allocation10 + $0x8] sm:$0xff] %v122
    %127 = vst [vmem:[#allocation10 + $0x10] sm:$0xff] %v123
    %128 = vst [vmem:[#allocation10 + $0x18] sm:$0xff] %v124
    // Predicated region
    $region34: #{tpu_custom_call.1} parent=1 // pred_check
      _
    $region35: #{tpu_custom_call.1} parent=1 // pred_check_branch
      %130 = sbr.rel (0) target = $region37
    $region36: #{tpu_custom_call.1} parent=1 // pred_region
      %s132 = ssub.s32 512, 512
      %133 = vsyncadd [#allocation4], %s132
      %s134 = sshll.u32 [#allocation10], 4
      %s135 = int_to_ptr.vmem [resolvable:$true] %s134
      %140 = dma.vmem_to_hbm [thread:$0]  %s135, 512, %s4, [#allocation4], 128, 128, 8
    $region37: #{tpu_custom_call.1} parent=1 // pred_fallthru
      _
    // Predicated region
    $region38: #{tpu_custom_call.1} parent=1 // pred_check
      _
    $region39: #{tpu_custom_call.1} parent=1 // pred_check_branch
      %142 = sbr.rel (0) target = $region41
    $region40: #{tpu_custom_call.1} parent=1 // pred_region
      %143 = dma.done [#allocation4], 512
    $region41: #{tpu_custom_call.1} parent=1 // pred_fallthru
      _
    %144 = vsyncpa [#allocation3], 1
    %145 = vsyncpa [#allocation6], 1
    %146 = vsyncpa [#allocation9], 1
    %147 = vsyncpa [#allocation4], 1

</llo_original>
